<compile_context>
chip_gen: v5e
topology: v5e:2x2
jax: 0.10.0
libtpu: 0.0.40
codegen_flags: <defaults>
</compile_context>

<pallas_src>
import jax
import jax.numpy as jnp
import numpy as np
from jax.experimental import pallas as pl
from jax.experimental.pallas import tpu as pltpu


# ----------------------------------------------------------------------------- kernel
def decay_head_kernel(x_ref, combo4_ref, wbig_ref, wdrs_ref,
                      bns_ref, bnb_ref, w1t_ref, b1_ref, w2t_ref, b2_ref,
                      out_ref):
    """Batch-last layout: every tensor is (features, BT); lanes carry the batch."""
    nt = wdrs_ref.shape[0]                               # ntotal

    X = x_ref[...]                                       # (4*nobj, BT) f32, row = comp*nobj+obj

    # ---- CoLa: all 4 components in one matmul (combo4 = kron(I4, combo_full)) ----
    V = jnp.dot(combo4_ref[...], X, preferred_element_type=jnp.float32)   # (4*nt, BT)
    E  = V[0 * nt:1 * nt]
    px = V[1 * nt:2 * nt]
    py = V[2 * nt:3 * nt]
    pz = V[3 * nt:4 * nt]

    # ---- LoLa invariants (f32, lane-dense VPU work) ----
    m2 = E * E - px * px - py * py - pz * pz             # (nt, BT)
    pt = jnp.sqrt(px * px + py * py)                     # (nt, BT)

    # One fused (6*nt, 5*nt) matmul covers w_ener@E and w_dist@{E,px,py,pz,m2}.
    S = jnp.concatenate([E, px, py, pz, m2], axis=0)                      # (5*nt, BT)
    U = jnp.dot(wbig_ref[...], S, preferred_element_type=jnp.float32)     # (6*nt, BT)
    w_en = U[0 * nt:1 * nt]
    uE   = U[1 * nt:2 * nt]
    upx  = U[2 * nt:3 * nt]
    upy  = U[3 * nt:4 * nt]
    upz  = U[4 * nt:5 * nt]
    um2  = U[5 * nt:6 * nt]

    # w_d[i,b] = sum_j w_dist[i,j]*d2[i,j,b] without the (nt,nt,BT) gram tensor:
    #   d2 = m2_i + m2_j - 2*(E_i E_j - px_i px_j - py_i py_j - pz_i pz_j)
    cross = E * uE - px * upx - py * upy - pz * upz
    w_d = m2 * wdrs_ref[...] + um2 - 2.0 * cross         # (nt, BT)

    # feature-major flatten: [m2 | pT | E | w.E | w.d2] -> (5*nt, BT)
    flat = jnp.concatenate([m2, pt, E, w_en, w_d], axis=0)

    # ---- BatchNorm1d (eval mode, folded per-feature affine), f32 ----
    h = flat * bns_ref[...] + bnb_ref[...]               # (nfeat, BT)

    # ---- FeedForwardHead: Linear -> ReLU -> Linear -> Sigmoid (bf16 MXU, f32 acc) ----
    h1 = jnp.dot(w1t_ref[...], h.astype(jnp.bfloat16),
                 preferred_element_type=jnp.float32) + b1_ref[...]        # (nhid_p, BT)
    h1 = jnp.maximum(h1, 0.0)
    logits = jnp.dot(w2t_ref[...], h1.astype(jnp.bfloat16),
                     preferred_element_type=jnp.float32) + b2_ref[...]    # (nout, BT)
    out_ref[...] = jax.nn.sigmoid(logits)


# ----------------------------------------------------------------------------- wrapper
def _round_up(n, m):
    return (n + m - 1) // m * m


def pack_params(p, nhid_pad_to=128):
    """Re-layout the logical DecayHead parameters for the batch-last kernel."""
    combo = p['combo_full']                              # (ntotal, nobj)
    ntotal, nobj = combo.shape
    w_ener, w_dist = p['w_ener'], p['w_dist']
    nfeat = p['bn_scale'].shape[1]
    nhid = p['w1'].shape[1]
    nout = p['w2'].shape[1]
    nhid_p = _round_up(nhid, nhid_pad_to)                # 200 -> 256

    combo4 = jnp.kron(jnp.eye(4, dtype=jnp.float32), combo)   # (4*ntotal, 4*nobj)

    Z = jnp.zeros((ntotal, ntotal), jnp.float32)
    wbig = jnp.concatenate([
        jnp.concatenate([w_ener, Z, Z, Z, Z], axis=1),   # -> w_ener @ E
        jnp.concatenate([w_dist, Z, Z, Z, Z], axis=1),   # -> w_dist @ E
        jnp.concatenate([Z, w_dist, Z, Z, Z], axis=1),   # -> w_dist @ px
        jnp.concatenate([Z, Z, w_dist, Z, Z], axis=1),   # -> w_dist @ py
        jnp.concatenate([Z, Z, Z, w_dist, Z], axis=1),   # -> w_dist @ pz
        jnp.concatenate([Z, Z, Z, Z, w_dist], axis=1),   # -> w_dist @ m2
    ], axis=0)                                           # (6*ntotal, 5*ntotal)
    wdrs = jnp.sum(w_dist, axis=1, keepdims=True)        # (ntotal, 1)

    bns = p['bn_scale'].reshape(nfeat, 1)
    bnb = p['bn_shift'].reshape(nfeat, 1)

    w1t = jnp.zeros((nhid_p, nfeat), jnp.float32).at[:nhid].set(p['w1'].T)
    b1 = jnp.zeros((nhid_p, 1), jnp.float32).at[:nhid, 0].set(p['b1'].reshape(-1))
    w2t = jnp.zeros((nout, nhid_p), jnp.float32).at[:, :nhid].set(p['w2'].T)
    b2 = p['b2'].reshape(nout, 1)

    return dict(combo4=combo4, wbig=wbig, wdrs=wdrs, bns=bns, bnb=bnb,
                w1t=w1t.astype(jnp.bfloat16), b1=b1,
                w2t=w2t.astype(jnp.bfloat16), b2=b2,
                nobj=nobj, ntotal=ntotal, nout=nout)


def decay_head_forward(x, p, *, batch_tile=None):
    """x: (B, nobjects, 4) float32.  Returns (B, 11) float32."""
    B, nobj, ncomp = x.shape
    assert ncomp == 4
    kp = pack_params(p)
    assert kp['nobj'] == nobj

    # Adaptive batch tile (see header): resident single step for small B,
    # 1024 (mult. of 128 and 256) for large B so the grid pipelines and can
    # shard across v7x's two TensorCores.
    if batch_tile is None:
        batch_tile = B if B <= 1024 else 1024
    bpad = _round_up(B, batch_tile)

    # Batch-last layout: (4*nobj, B) with rows ordered component-major, object-minor.
    x_t = jnp.transpose(x, (2, 1, 0)).reshape(4 * nobj, B)
    if bpad != B:
        x_t = jnp.pad(x_t, ((0, 0), (0, bpad - B)))

    nout = kp['nout']
    grid = (bpad // batch_tile,)

    def param_spec(arr):                                  # small weights: full block
        return pl.BlockSpec(arr.shape, lambda i: (0, 0))

    in_specs = [
        pl.BlockSpec((4 * nobj, batch_tile), lambda i: (0, i)),   # x_t tiled on batch (lanes)
        param_spec(kp['combo4']), param_spec(kp['wbig']), param_spec(kp['wdrs']),
        param_spec(kp['bns']), param_spec(kp['bnb']),
        param_spec(kp['w1t']), param_spec(kp['b1']),
        param_spec(kp['w2t']), param_spec(kp['b2']),
    ]
    out_spec = pl.BlockSpec((nout, batch_tile), lambda i: (0, i))  # lane-dense stores

    out_t = pl.pallas_call(
        decay_head_kernel,
        out_shape=jax.ShapeDtypeStruct((nout, bpad), jnp.float32),
        grid=grid,
        in_specs=in_specs,
        out_specs=out_spec,
        compiler_params=pltpu.CompilerParams(dimension_semantics=("parallel",)),
    )(x_t, kp['combo4'], kp['wbig'], kp['wdrs'], kp['bns'], kp['bnb'],
      kp['w1t'], kp['b1'], kp['w2t'], kp['b2'])

    return out_t[:, :B].T                                 # (B, nout)


# ----------------------------------------------------------------------------- params / reference
def init_params(key, nobjects=6, ncombos=10, fflayers=(200,), nout=11,
                nextrafields=0, nscalars=0):
    ntotal = nobjects + ncombos
    nfeat = ntotal * (5 + nextrafields) + nscalars
    nhid = fflayers[0]
    ks = jax.random.split(key, 11)
    w_combo = 0.3 * jax.random.normal(ks[0], (ncombos, nobjects), jnp.float32)
    combo_full = jnp.concatenate(
        [jnp.eye(nobjects, dtype=jnp.float32), w_combo], axis=0)      # (ntotal, nobjects)
    w_ener = 0.3 * jax.random.normal(ks[1], (ntotal, ntotal), jnp.float32)
    w_dist = 0.3 * jax.random.normal(ks[2], (ntotal, ntotal), jnp.float32)
    gamma = 1.0 + 0.1 * jax.random.normal(ks[3], (nfeat,), jnp.float32)
    beta = 0.1 * jax.random.normal(ks[4], (nfeat,), jnp.float32)
    run_mean = 0.1 * jax.random.normal(ks[5], (nfeat,), jnp.float32)
    run_var = 0.5 + jnp.abs(jax.random.normal(ks[6], (nfeat,), jnp.float32))
    eps = 1e-5
    bn_scale = gamma / jnp.sqrt(run_var + eps)
    bn_shift = beta - run_mean * bn_scale
    w1 = jax.random.normal(ks[7], (nfeat, nhid), jnp.float32) / np.sqrt(nfeat)
    b1 = 0.1 * jax.random.normal(ks[8], (nhid,), jnp.float32)
    w2 = jax.random.normal(ks[9], (nhid, nout), jnp.float32) / np.sqrt(nhid)
    b2 = 0.1 * jax.random.normal(ks[10], (nout,), jnp.float32)
    return dict(combo_full=combo_full, w_ener=w_ener, w_dist=w_dist,
                bn_scale=bn_scale.reshape(1, nfeat),
                bn_shift=bn_shift.reshape(1, nfeat),
                w1=w1, b1=b1.reshape(1, nhid),
                w2=w2, b2=b2.reshape(1, nout))


def decay_head_reference(x, p):
    """Pure-JAX f32 reference using the explicit pairwise-difference distance formula."""
    combo = p['combo_full']
    v = jnp.einsum('ij,bjk->bik', combo, x)
    metric = jnp.array([1.0, -1.0, -1.0, -1.0], jnp.float32)
    m2 = jnp.einsum('bik,k,bik->bi', v, metric, v)
    pt = jnp.sqrt(v[:, :, 1] ** 2 + v[:, :, 2] ** 2)
    en = v[:, :, 0]
    w_en = jnp.einsum('ij,bj->bi', p['w_ener'], en)
    diff = v[:, :, None, :] - v[:, None, :, :]
    d2 = jnp.einsum('bijk,k,bijk->bij', diff, metric, diff)
    w_d = jnp.einsum('ij,bij->bi', p['w_dist'], d2)
    flat = jnp.concatenate([m2, pt, en, w_en, w_d], axis=1)
    h = flat * p['bn_scale'] + p['bn_shift']
    h1 = jnp.maximum(h @ p['w1'] + p['b1'], 0.0)
    return jax.nn.sigmoid(h1 @ p['w2'] + p['b2'])


if __name__ == "__main__":
    key = jax.random.PRNGKey(0)
    kx, kp = jax.random.split(key)
    B, nobjects, ncombos = 16, 6, 10          # ntotal = 16, features = 16*5 = 80
    x = jax.random.normal(kx, (B, nobjects, 4), jnp.float32)
    params = init_params(kp, nobjects=nobjects, ncombos=ncombos)

    out = decay_head_forward(x, params)
    out = jax.block_until_ready(out)
    ref = decay_head_reference(x, params)

    assert out.shape == (B, 11), out.shape
    np.testing.assert_allclose(np.asarray(out), np.asarray(ref), atol=3e-2, rtol=3e-2)
    print("KERNEL_OK")
</pallas_src>

<mosaic_0001>
module attributes {stable_mosaic.version = 11 : i64} {
  func.func @decay_head_kernel(%arg0: i32, %arg1: memref<24x16xf32, #tpu.memory_space<vmem>>, %arg2: memref<64x24xf32, #tpu.memory_space<vmem>>, %arg3: memref<96x80xf32, #tpu.memory_space<vmem>>, %arg4: memref<16x1xf32, #tpu.memory_space<vmem>>, %arg5: memref<80x1xf32, #tpu.memory_space<vmem>>, %arg6: memref<80x1xf32, #tpu.memory_space<vmem>>, %arg7: memref<256x80xbf16, #tpu.memory_space<vmem>>, %arg8: memref<256x1xf32, #tpu.memory_space<vmem>>, %arg9: memref<11x256xbf16, #tpu.memory_space<vmem>>, %arg10: memref<11x1xf32, #tpu.memory_space<vmem>>, %arg11: memref<11x16xf32, #tpu.memory_space<vmem>>) attributes {dimension_semantics = [#tpu.dimension_semantics<parallel>], iteration_bounds = array<i64: 1>, scalar_prefetch = 0 : i64, scratch_operands = 0 : i64, tpu.core_type = #tpu.core_type<tc>, window_params = [{transform_indices = @transform_0, window_bounds = array<i64: 24, 16>}, {pipeline_mode = #tpu.pipeline_mode<synchronous>, transform_indices = @transform_1, window_bounds = array<i64: 64, 24>}, {pipeline_mode = #tpu.pipeline_mode<synchronous>, transform_indices = @transform_2, window_bounds = array<i64: 96, 80>}, {pipeline_mode = #tpu.pipeline_mode<synchronous>, transform_indices = @transform_3, window_bounds = array<i64: 16, 1>}, {pipeline_mode = #tpu.pipeline_mode<synchronous>, transform_indices = @transform_4, window_bounds = array<i64: 80, 1>}, {pipeline_mode = #tpu.pipeline_mode<synchronous>, transform_indices = @transform_5, window_bounds = array<i64: 80, 1>}, {pipeline_mode = #tpu.pipeline_mode<synchronous>, transform_indices = @transform_6, window_bounds = array<i64: 256, 80>}, {pipeline_mode = #tpu.pipeline_mode<synchronous>, transform_indices = @transform_7, window_bounds = array<i64: 256, 1>}, {pipeline_mode = #tpu.pipeline_mode<synchronous>, transform_indices = @transform_8, window_bounds = array<i64: 11, 256>}, {pipeline_mode = #tpu.pipeline_mode<synchronous>, transform_indices = @transform_9, window_bounds = array<i64: 11, 1>}, {transform_indices = @transform_10, window_bounds = array<i64: 11, 16>}]} {
    %c0 = arith.constant 0 : index
    %c0_0 = arith.constant 0 : index
    %0 = vector.load %arg1[%c0, %c0_0] : memref<24x16xf32, #tpu.memory_space<vmem>>, vector<24x16xf32>
    %c0_1 = arith.constant 0 : index
    %c0_2 = arith.constant 0 : index
    %1 = vector.load %arg2[%c0_1, %c0_2] : memref<64x24xf32, #tpu.memory_space<vmem>>, vector<64x24xf32>
    %cst = arith.constant dense<0.000000e+00> : vector<64x16xf32>
    %2 = tpu.matmul %1, %0, %cst {dimension_numbers = #tpu.dot_dimension_numbers<[1], [0], [0], [1], [0, 0, 1, 1], [], []>} : vector<64x24xf32>, vector<24x16xf32>, vector<64x16xf32> -> vector<64x16xf32>
    %3 = vector.extract_strided_slice %2 {offsets = [0, 0], sizes = [16, 16], strides = [1, 1]} : vector<64x16xf32> to vector<16x16xf32>
    %4 = vector.extract_strided_slice %2 {offsets = [16, 0], sizes = [16, 16], strides = [1, 1]} : vector<64x16xf32> to vector<16x16xf32>
    %5 = vector.extract_strided_slice %2 {offsets = [32, 0], sizes = [16, 16], strides = [1, 1]} : vector<64x16xf32> to vector<16x16xf32>
    %6 = vector.extract_strided_slice %2 {offsets = [48, 0], sizes = [16, 16], strides = [1, 1]} : vector<64x16xf32> to vector<16x16xf32>
    %7 = arith.mulf %3, %3 : vector<16x16xf32>
    %8 = arith.mulf %4, %4 : vector<16x16xf32>
    %9 = arith.subf %7, %8 : vector<16x16xf32>
    %10 = arith.mulf %5, %5 : vector<16x16xf32>
    %11 = arith.subf %9, %10 : vector<16x16xf32>
    %12 = arith.mulf %6, %6 : vector<16x16xf32>
    %13 = arith.subf %11, %12 : vector<16x16xf32>
    %14 = arith.mulf %4, %4 : vector<16x16xf32>
    %15 = arith.mulf %5, %5 : vector<16x16xf32>
    %16 = arith.addf %14, %15 : vector<16x16xf32>
    %17 = math.sqrt %16 : vector<16x16xf32>
    %18 = tpu.concatenate %3, %4, %5, %6, %13 in 0 : vector<16x16xf32>, vector<16x16xf32>, vector<16x16xf32>, vector<16x16xf32>, vector<16x16xf32> -> vector<80x16xf32>
    %c0_3 = arith.constant 0 : index
    %c0_4 = arith.constant 0 : index
    %19 = vector.load %arg3[%c0_3, %c0_4] : memref<96x80xf32, #tpu.memory_space<vmem>>, vector<96x80xf32>
    %cst_5 = arith.constant dense<0.000000e+00> : vector<96x16xf32>
    %20 = tpu.matmul %19, %18, %cst_5 {dimension_numbers = #tpu.dot_dimension_numbers<[1], [0], [0], [1], [0, 0, 1, 1], [], []>} : vector<96x80xf32>, vector<80x16xf32>, vector<96x16xf32> -> vector<96x16xf32>
    %21 = vector.extract_strided_slice %20 {offsets = [0, 0], sizes = [16, 16], strides = [1, 1]} : vector<96x16xf32> to vector<16x16xf32>
    %22 = vector.extract_strided_slice %20 {offsets = [16, 0], sizes = [16, 16], strides = [1, 1]} : vector<96x16xf32> to vector<16x16xf32>
    %23 = vector.extract_strided_slice %20 {offsets = [32, 0], sizes = [16, 16], strides = [1, 1]} : vector<96x16xf32> to vector<16x16xf32>
    %24 = vector.extract_strided_slice %20 {offsets = [48, 0], sizes = [16, 16], strides = [1, 1]} : vector<96x16xf32> to vector<16x16xf32>
    %25 = vector.extract_strided_slice %20 {offsets = [64, 0], sizes = [16, 16], strides = [1, 1]} : vector<96x16xf32> to vector<16x16xf32>
    %26 = vector.extract_strided_slice %20 {offsets = [80, 0], sizes = [16, 16], strides = [1, 1]} : vector<96x16xf32> to vector<16x16xf32>
    %27 = arith.mulf %3, %22 : vector<16x16xf32>
    %28 = arith.mulf %4, %23 : vector<16x16xf32>
    %29 = arith.subf %27, %28 : vector<16x16xf32>
    %30 = arith.mulf %5, %24 : vector<16x16xf32>
    %31 = arith.subf %29, %30 : vector<16x16xf32>
    %32 = arith.mulf %6, %25 : vector<16x16xf32>
    %33 = arith.subf %31, %32 : vector<16x16xf32>
    %c0_6 = arith.constant 0 : index
    %c0_7 = arith.constant 0 : index
    %34 = vector.load %arg4[%c0_6, %c0_7] : memref<16x1xf32, #tpu.memory_space<vmem>>, vector<16x1xf32>
    %35 = vector.broadcast %34 : vector<16x1xf32> to vector<16x16xf32>
    %36 = arith.mulf %13, %35 : vector<16x16xf32>
    %37 = arith.addf %36, %26 : vector<16x16xf32>
    %cst_8 = arith.constant 2.000000e+00 : f32
    %38 = vector.broadcast %cst_8 : f32 to vector<16x16xf32>
    %39 = arith.mulf %38, %33 : vector<16x16xf32>
    %40 = arith.subf %37, %39 : vector<16x16xf32>
    %41 = tpu.concatenate %13, %17, %3, %21, %40 in 0 : vector<16x16xf32>, vector<16x16xf32>, vector<16x16xf32>, vector<16x16xf32>, vector<16x16xf32> -> vector<80x16xf32>
    %c0_9 = arith.constant 0 : index
    %c0_10 = arith.constant 0 : index
    %42 = vector.load %arg5[%c0_9, %c0_10] : memref<80x1xf32, #tpu.memory_space<vmem>>, vector<80x1xf32>
    %43 = vector.broadcast %42 : vector<80x1xf32> to vector<80x16xf32>
    %44 = arith.mulf %41, %43 : vector<80x16xf32>
    %c0_11 = arith.constant 0 : index
    %c0_12 = arith.constant 0 : index
    %45 = vector.load %arg6[%c0_11, %c0_12] : memref<80x1xf32, #tpu.memory_space<vmem>>, vector<80x1xf32>
    %46 = vector.broadcast %45 : vector<80x1xf32> to vector<80x16xf32>
    %47 = arith.addf %44, %46 : vector<80x16xf32>
    %c0_13 = arith.constant 0 : index
    %c0_14 = arith.constant 0 : index
    %48 = vector.load %arg7[%c0_13, %c0_14] : memref<256x80xbf16, #tpu.memory_space<vmem>>, vector<256x80xbf16>
    %49 = arith.truncf %47 : vector<80x16xf32> to vector<80x16xbf16>
    %cst_15 = arith.constant dense<0.000000e+00> : vector<256x16xf32>
    %50 = tpu.matmul %48, %49, %cst_15 {dimension_numbers = #tpu.dot_dimension_numbers<[1], [0], [0], [1], [0, 0, 1, 1], [], []>} : vector<256x80xbf16>, vector<80x16xbf16>, vector<256x16xf32> -> vector<256x16xf32>
    %c0_16 = arith.constant 0 : index
    %c0_17 = arith.constant 0 : index
    %51 = vector.load %arg8[%c0_16, %c0_17] : memref<256x1xf32, #tpu.memory_space<vmem>>, vector<256x1xf32>
    %52 = vector.broadcast %51 : vector<256x1xf32> to vector<256x16xf32>
    %53 = arith.addf %50, %52 : vector<256x16xf32>
    %cst_18 = arith.constant 0.000000e+00 : f32
    %54 = vector.broadcast %cst_18 : f32 to vector<256x16xf32>
    %55 = arith.maximumf %53, %54 : vector<256x16xf32>
    %c0_19 = arith.constant 0 : index
    %c0_20 = arith.constant 0 : index
    %56 = vector.load %arg9[%c0_19, %c0_20] : memref<11x256xbf16, #tpu.memory_space<vmem>>, vector<11x256xbf16>
    %57 = arith.truncf %55 : vector<256x16xf32> to vector<256x16xbf16>
    %cst_21 = arith.constant dense<0.000000e+00> : vector<11x16xf32>
    %58 = tpu.matmul %56, %57, %cst_21 {dimension_numbers = #tpu.dot_dimension_numbers<[1], [0], [0], [1], [0, 0, 1, 1], [], []>} : vector<11x256xbf16>, vector<256x16xbf16>, vector<11x16xf32> -> vector<11x16xf32>
    %c0_22 = arith.constant 0 : index
    %c0_23 = arith.constant 0 : index
    %59 = vector.load %arg10[%c0_22, %c0_23] : memref<11x1xf32, #tpu.memory_space<vmem>>, vector<11x1xf32>
    %60 = vector.broadcast %59 : vector<11x1xf32> to vector<11x16xf32>
    %61 = arith.addf %58, %60 : vector<11x16xf32>
    %62 = arith.negf %61 : vector<11x16xf32>
    %63 = math.exp %62 : vector<11x16xf32>
    %cst_24 = arith.constant 1.000000e+00 : f32
    %64 = vector.broadcast %cst_24 : f32 to vector<11x16xf32>
    %65 = arith.addf %64, %63 : vector<11x16xf32>
    %66 = arith.divf %64, %65 : vector<11x16xf32>
    %c0_25 = arith.constant 0 : index
    %c0_26 = arith.constant 0 : index
    %67 = vector.load %arg11[%c0_25, %c0_26] : memref<11x16xf32, #tpu.memory_space<vmem>>, vector<11x16xf32>
    tpu.vector_store %arg11[%c0_25, %c0_26], %66 {strides = array<i32>} : memref<11x16xf32, #tpu.memory_space<vmem>>, vector<11x16xf32>,
    return
  }
  func.func @transform_0(%arg0: i32) -> (i32, i32) {
    %c0_i32 = arith.constant 0 : i32
    %c0_i32_0 = arith.constant 0 : i32
    return %c0_i32, %arg0 : i32, i32
  }
  func.func @transform_1(%arg0: i32) -> (i32, i32) {
    %c0_i32 = arith.constant 0 : i32
    %c0_i32_0 = arith.constant 0 : i32
    %c0_i32_1 = arith.constant 0 : i32
    return %c0_i32, %c0_i32_0 : i32, i32
  }
  func.func @transform_2(%arg0: i32) -> (i32, i32) {
    %c0_i32 = arith.constant 0 : i32
    %c0_i32_0 = arith.constant 0 : i32
    %c0_i32_1 = arith.constant 0 : i32
    return %c0_i32, %c0_i32_0 : i32, i32
  }
  func.func @transform_3(%arg0: i32) -> (i32, i32) {
    %c0_i32 = arith.constant 0 : i32
    %c0_i32_0 = arith.constant 0 : i32
    %c0_i32_1 = arith.constant 0 : i32
    return %c0_i32, %c0_i32_0 : i32, i32
  }
  func.func @transform_4(%arg0: i32) -> (i32, i32) {
    %c0_i32 = arith.constant 0 : i32
    %c0_i32_0 = arith.constant 0 : i32
    %c0_i32_1 = arith.constant 0 : i32
    return %c0_i32, %c0_i32_0 : i32, i32
  }
  func.func @transform_5(%arg0: i32) -> (i32, i32) {
    %c0_i32 = arith.constant 0 : i32
    %c0_i32_0 = arith.constant 0 : i32
    %c0_i32_1 = arith.constant 0 : i32
    return %c0_i32, %c0_i32_0 : i32, i32
  }
  func.func @transform_6(%arg0: i32) -> (i32, i32) {
    %c0_i32 = arith.constant 0 : i32
    %c0_i32_0 = arith.constant 0 : i32
    %c0_i32_1 = arith.constant 0 : i32
    return %c0_i32, %c0_i32_0 : i32, i32
  }
  func.func @transform_7(%arg0: i32) -> (i32, i32) {
    %c0_i32 = arith.constant 0 : i32
    %c0_i32_0 = arith.constant 0 : i32
    %c0_i32_1 = arith.constant 0 : i32
    return %c0_i32, %c0_i32_0 : i32, i32
  }
  func.func @transform_8(%arg0: i32) -> (i32, i32) {
    %c0_i32 = arith.constant 0 : i32
    %c0_i32_0 = arith.constant 0 : i32
    %c0_i32_1 = arith.constant 0 : i32
    return %c0_i32, %c0_i32_0 : i32, i32
  }
  func.func @transform_9(%arg0: i32) -> (i32, i32) {
    %c0_i32 = arith.constant 0 : i32
    %c0_i32_0 = arith.constant 0 : i32
    %c0_i32_1 = arith.constant 0 : i32
    return %c0_i32, %c0_i32_0 : i32, i32
  }
  func.func @transform_10(%arg0: i32) -> (i32, i32) {
    %c0_i32 = arith.constant 0 : i32
    %c0_i32_0 = arith.constant 0 : i32
    return %c0_i32, %arg0 : i32, i32
  }
}

</mosaic_0001>

<llo_original>
// kernel: tpu_custom_call.1
$region0: #{tpu_custom_call.1}
  #allocation0 [shape = 'u32[]', space=smem, size = 0x4, offset = 0x4, fixed_abs, tag = 'smem constant byte address 0x4 - core index']
  #allocation1 [shape = 'u32[72,128]{1,0:T(1,128)}', space=vmem, size = 0x9000, scoped, tag = 'internal scratch']
  %s0 = inlined_call_operand.vmem [shape: f32[24,16], index: 0, kind: input, shape index: {}]
  %s1 = inlined_call_operand.vmem [shape: f32[64,24], index: 1, kind: input, shape index: {}]
  %s2 = inlined_call_operand.vmem [shape: f32[96,80], index: 2, kind: input, shape index: {}]
  %s3 = inlined_call_operand.vmem [shape: f32[16,1], index: 3, kind: input, shape index: {}]
  %s4 = inlined_call_operand.vmem [shape: f32[80,1], index: 4, kind: input, shape index: {}]
  %s5 = inlined_call_operand.vmem [shape: f32[80,1], index: 5, kind: input, shape index: {}]
  %s6 = inlined_call_operand.vmem [shape: bf16[256,80], index: 6, kind: input, shape index: {}]
  %s7 = inlined_call_operand.vmem [shape: f32[256,1], index: 7, kind: input, shape index: {}]
  %s8 = inlined_call_operand.vmem [shape: bf16[11,256], index: 8, kind: input, shape index: {}]
  %s9 = inlined_call_operand.vmem [shape: f32[11,1], index: 9, kind: input, shape index: {}]
  %s10 = inlined_call_operand.hbm [shape: f32[11,16], index: 10, kind: output, shape index: {}]
  %s11 = sld [smem:[#allocation0]]
  $region50: #{tpu_custom_call.1} parent=0
    _
  %s13 = ssub.s32 1, %s11
  %s14 = scalar_select 0, %s13, %s11
  $region1: #{tpu_custom_call.1} parent=0
    #allocation2 [shape = 'u8[8192]{0}', space=vmem, size = 0x2000, scoped, tag = 'output window, operand 0, single buffered']
    #allocation3 [shape = 's32[1]{0}', space=sflag, size = 0x4, scoped, tag = 'scoped memory for tpu_custom_call.1']
    %15 = vsyncpa [#allocation3], 0
    // Predicated region
    $region2: #{tpu_custom_call.1} parent=1 // pred_check
      _
    $region3: #{tpu_custom_call.1} parent=1 // pred_check_branch
      %17 = sbr.rel (0) target = $region5
    $region4: #{tpu_custom_call.1} parent=1 // pred_region
      _
    $region5: #{tpu_custom_call.1} parent=1 // pred_fallthru
      _
    // Predicated region
    $region6: #{tpu_custom_call.1} parent=1 // pred_check
      _
    $region7: #{tpu_custom_call.1} parent=1 // pred_check_branch
      %19 = sbr.rel (0) target = $region9
    $region8: #{tpu_custom_call.1} parent=1 // pred_region
      _
    $region9: #{tpu_custom_call.1} parent=1 // pred_fallthru
      _
    // Predicated region
    $region10: #{tpu_custom_call.1} parent=1 // pred_check
      _
    $region11: #{tpu_custom_call.1} parent=1 // pred_check_branch
      %21 = sbr.rel (0) target = $region13
    $region12: #{tpu_custom_call.1} parent=1 // pred_region
      _
    $region13: #{tpu_custom_call.1} parent=1 // pred_fallthru
      _
    // Predicated region
    $region14: #{tpu_custom_call.1} parent=1 // pred_check
      _
    $region15: #{tpu_custom_call.1} parent=1 // pred_check_branch
      %23 = sbr.rel (0) target = $region17
    $region16: #{tpu_custom_call.1} parent=1 // pred_region
      _
    $region17: #{tpu_custom_call.1} parent=1 // pred_fallthru
      _
    // Predicated region
    $region18: #{tpu_custom_call.1} parent=1 // pred_check
      _
    $region19: #{tpu_custom_call.1} parent=1 // pred_check_branch
      %25 = sbr.rel (0) target = $region21
    $region20: #{tpu_custom_call.1} parent=1 // pred_region
      _
    $region21: #{tpu_custom_call.1} parent=1 // pred_fallthru
      _
    // Predicated region
    $region22: #{tpu_custom_call.1} parent=1 // pred_check
      _
    $region23: #{tpu_custom_call.1} parent=1 // pred_check_branch
      %27 = sbr.rel (0) target = $region25
    $region24: #{tpu_custom_call.1} parent=1 // pred_region
      _
    $region25: #{tpu_custom_call.1} parent=1 // pred_fallthru
      _
    // Predicated region
    $region26: #{tpu_custom_call.1} parent=1 // pred_check
      _
    $region27: #{tpu_custom_call.1} parent=1 // pred_check_branch
      %29 = sbr.rel (0) target = $region29
    $region28: #{tpu_custom_call.1} parent=1 // pred_region
      _
    $region29: #{tpu_custom_call.1} parent=1 // pred_fallthru
      _
    // Predicated region
    $region30: #{tpu_custom_call.1} parent=1 // pred_check
      _
    $region31: #{tpu_custom_call.1} parent=1 // pred_check_branch
      %31 = sbr.rel (0) target = $region33
    $region32: #{tpu_custom_call.1} parent=1 // pred_region
      _
    $region33: #{tpu_custom_call.1} parent=1 // pred_fallthru
      _
    // Predicated region
    $region34: #{tpu_custom_call.1} parent=1 // pred_check
      _
    $region35: #{tpu_custom_call.1} parent=1 // pred_check_branch
      %33 = sbr.rel (0) target = $region37
    $region36: #{tpu_custom_call.1} parent=1 // pred_region
      _
    $region37: #{tpu_custom_call.1} parent=1 // pred_fallthru
      _
    // Predicated region
    $region38: #{tpu_custom_call.1} parent=1 // pred_check
      _
    $region39: #{tpu_custom_call.1} parent=1 // pred_check_branch
      %35 = sbr.rel (0) target = $region41
    $region40: #{tpu_custom_call.1} parent=1 // pred_region
      _
    $region41: #{tpu_custom_call.1} parent=1 // pred_fallthru
      _
    %v37 = vld [vmem:[%s0] sm:$0xff]
    %v38 = vld [vmem:[%s0 + $0x8] sm:$0xff]
    %v39 = vld [vmem:[%s0 + $0x10] sm:$0xff]
    %v40 = vld [vmem:[%s1] sm:$0xff]
    %v41 = vld [vmem:[%s1 + $0x8] sm:$0xff]
    %v42 = vld [vmem:[%s1 + $0x10] sm:$0xff]
    %v43 = vld [vmem:[%s1 + $0x18] sm:$0xff]
    %v44 = vld [vmem:[%s1 + $0x20] sm:$0xff]
    %v45 = vld [vmem:[%s1 + $0x28] sm:$0xff]
    %v46 = vld [vmem:[%s1 + $0x30] sm:$0xff]
    %v47 = vld [vmem:[%s1 + $0x38] sm:$0xff]
    %vm48 = vcmask 195584
    %v50 = vsel %vm48, %v40, 0
    %v53 = vsel %vm48, %v41, 0
    %v56 = vsel %vm48, %v42, 0
    %v59 = vsel %vm48, %v43, 0
    %v62 = vsel %vm48, %v44, 0
    %v65 = vsel %vm48, %v45, 0
    %v68 = vsel %vm48, %v46, 0
    %v71 = vsel %vm48, %v47, 0
    %73 = vmatpush.msra.mxu0 0.0
    %74 = vmatpush.msra.mxu0 0.0
    %75 = vmatpush.msra.mxu0 0.0
    %76 = vmatpush.msra.mxu0 0.0
    %77 = vmatpush.msra.mxu0 0.0
    %78 = vmatpush.msra.mxu0 0.0
    %79 = vmatpush.msra.mxu0 0.0
    %80 = vmatpush.msra.mxu0 0.0
    %81 = vmatpush.msra.mxu0 0.0
    %82 = vmatpush.msra.mxu0 0.0
    %83 = vmatpush.msra.mxu0 0.0
    %84 = vmatpush.msra.mxu0 0.0
    %85 = vmatpush.msra.mxu0 0.0
    %86 = vmatpush.msra.mxu0 %v39
    %87 = vmatpush.msra.mxu0 %v38
    %88 = vmatpush.msra.mxu0 %v37
    %89 = vmatmul.f32.gmra.mxu0 %v50
    %v90 = vpop.f32.mrf.mxu0
    %v91 = vadd.f32 0.0, %v90
    %92 = vmatmul.f32.gmra.mxu0 %v53
    %v93 = vpop.f32.mrf.mxu0
    %v94 = vadd.f32 0.0, %v93
    %95 = vmatmul.f32.gmra.mxu0 %v56
    %v96 = vpop.f32.mrf.mxu0
    %v97 = vadd.f32 0.0, %v96
    %98 = vmatmul.f32.gmra.mxu0 %v59
    %v99 = vpop.f32.mrf.mxu0
    %v100 = vadd.f32 0.0, %v99
    %101 = vmatmul.f32.gmra.mxu0 %v62
    %v102 = vpop.f32.mrf.mxu0
    %v103 = vadd.f32 0.0, %v102
    %104 = vmatmul.f32.gmra.mxu0 %v65
    %v105 = vpop.f32.mrf.mxu0
    %v106 = vadd.f32 0.0, %v105
    %107 = vmatmul.f32.gmra.mxu0 %v68
    %v108 = vpop.f32.mrf.mxu0
    %v109 = vadd.f32 0.0, %v108
    %110 = vmatmul.f32.gmra.mxu0 %v71
    %v111 = vpop.f32.mrf.mxu0
    %v112 = vadd.f32 0.0, %v111
    %113 = vdwg.mxu0
    %v114 = vmul.f32 %v91, %v91
    %v115 = vmul.f32 %v94, %v94
    %v116 = vmul.f32 %v97, %v97
    %v117 = vmul.f32 %v100, %v100
    %v118 = vsub.f32 %v114, %v116
    %v119 = vsub.f32 %v115, %v117
    %v120 = vmul.f32 %v103, %v103
    %v121 = vmul.f32 %v106, %v106
    %v122 = vsub.f32 %v118, %v120
    %v123 = vsub.f32 %v119, %v121
    %v124 = vmul.f32 %v109, %v109
    %v125 = vmul.f32 %v112, %v112
    %v126 = vsub.f32 %v122, %v124
    %v127 = vsub.f32 %v123, %v125
    %v128 = vadd.f32 %v116, %v120
    %v129 = vadd.f32 %v117, %v121
    %v130 = vrsqrt.pop %v128
    %v131 = vmul.f32 %v130, %v128
    %v132 = vmul.f32 %v131, %v130
    %v133 = vmul.f32 0.5, %v132
    %v134 = vsub.f32 1.5, %v133
    %v135 = vmul.f32 %v130, %v134
    %v136 = vmul.f32 %v128, %v135
    %vm137 = vcmp.eq.f32.partialorder %v128, inf
    %v138 = vsel %vm137, %v128, %v136
    %vm139 = vcmp.eq.f32.partialorder %v128, 0.0
    %v140 = vand.u32 %v128, 2147483648
    %v141 = vsel %vm139, %v140, %v138
    %v142 = vrsqrt.pop %v129
    %v143 = vmul.f32 %v142, %v129
    %v144 = vmul.f32 %v143, %v142
    %v145 = vmul.f32 0.5, %v144
    %v146 = vsub.f32 1.5, %v145
    %v147 = vmul.f32 %v142, %v146
    %v148 = vmul.f32 %v129, %v147
    %vm149 = vcmp.eq.f32.partialorder %v129, inf
    %v150 = vsel %vm149, %v129, %v148
    %vm151 = vcmp.eq.f32.partialorder %v129, 0.0
    %v152 = vand.u32 %v129, 2147483648
    %v153 = vsel %vm151, %v152, %v150
    %v154 = vld [vmem:[%s2] sm:$0xff]
    %v155 = vld [vmem:[%s2 + $0x8] sm:$0xff]
    %v156 = vld [vmem:[%s2 + $0x10] sm:$0xff]
    %v157 = vld [vmem:[%s2 + $0x18] sm:$0xff]
    %v158 = vld [vmem:[%s2 + $0x20] sm:$0xff]
    %v159 = vld [vmem:[%s2 + $0x28] sm:$0xff]
    %v160 = vld [vmem:[%s2 + $0x30] sm:$0xff]
    %v161 = vld [vmem:[%s2 + $0x38] sm:$0xff]
    %v162 = vld [vmem:[%s2 + $0x40] sm:$0xff]
    %v163 = vld [vmem:[%s2 + $0x48] sm:$0xff]
    %v164 = vld [vmem:[%s2 + $0x50] sm:$0xff]
    %v165 = vld [vmem:[%s2 + $0x58] sm:$0xff]
    %vm166 = vcmask 654336
    %v168 = vsel %vm166, %v154, 0
    %v171 = vsel %vm166, %v155, 0
    %v174 = vsel %vm166, %v156, 0
    %v177 = vsel %vm166, %v157, 0
    %v180 = vsel %vm166, %v158, 0
    %v183 = vsel %vm166, %v159, 0
    %v186 = vsel %vm166, %v160, 0
    %v189 = vsel %vm166, %v161, 0
    %v192 = vsel %vm166, %v162, 0
    %v195 = vsel %vm166, %v163, 0
    %v198 = vsel %vm166, %v164, 0
    %v201 = vsel %vm166, %v165, 0
    %203 = vmatpush.msra.mxu0 0.0
    %204 = vmatpush.msra.mxu0 0.0
    %205 = vmatpush.msra.mxu0 0.0
    %206 = vmatpush.msra.mxu0 0.0
    %207 = vmatpush.msra.mxu0 0.0
    %208 = vmatpush.msra.mxu0 0.0
    %209 = vmatpush.msra.mxu0 %v127
    %210 = vmatpush.msra.mxu0 %v126
    %211 = vmatpush.msra.mxu0 %v112
    %212 = vmatpush.msra.mxu0 %v109
    %213 = vmatpush.msra.mxu0 %v106
    %214 = vmatpush.msra.mxu0 %v103
    %215 = vmatpush.msra.mxu0 %v100
    %216 = vmatpush.msra.mxu0 %v97
    %217 = vmatpush.msra.mxu0 %v94
    %218 = vmatpush.msra.mxu0 %v91
    %219 = vmatmul.f32.gmra.mxu0 %v168
    %v220 = vpop.f32.mrf.mxu0
    %v221 = vadd.f32 0.0, %v220
    %222 = vmatmul.f32.gmra.mxu0 %v171
    %v223 = vpop.f32.mrf.mxu0
    %v224 = vadd.f32 0.0, %v223
    %225 = vmatmul.f32.gmra.mxu0 %v174
    %v226 = vpop.f32.mrf.mxu0
    %v227 = vadd.f32 0.0, %v226
    %228 = vmatmul.f32.gmra.mxu0 %v177
    %v229 = vpop.f32.mrf.mxu0
    %v230 = vadd.f32 0.0, %v229
    %231 = vmatmul.f32.gmra.mxu0 %v180
    %v232 = vpop.f32.mrf.mxu0
    %v233 = vadd.f32 0.0, %v232
    %234 = vmatmul.f32.gmra.mxu0 %v183
    %v235 = vpop.f32.mrf.mxu0
    %v236 = vadd.f32 0.0, %v235
    %237 = vmatmul.f32.gmra.mxu0 %v186
    %v238 = vpop.f32.mrf.mxu0
    %v239 = vadd.f32 0.0, %v238
    %240 = vmatmul.f32.gmra.mxu0 %v189
    %v241 = vpop.f32.mrf.mxu0
    %v242 = vadd.f32 0.0, %v241
    %243 = vmatmul.f32.gmra.mxu0 %v192
    %v244 = vpop.f32.mrf.mxu0
    %v245 = vadd.f32 0.0, %v244
    %246 = vmatmul.f32.gmra.mxu0 %v195
    %v247 = vpop.f32.mrf.mxu0
    %v248 = vadd.f32 0.0, %v247
    %249 = vmatmul.f32.gmra.mxu0 %v198
    %v250 = vpop.f32.mrf.mxu0
    %v251 = vadd.f32 0.0, %v250
    %252 = vmatmul.f32.gmra.mxu0 %v201
    %v253 = vpop.f32.mrf.mxu0
    %v254 = vadd.f32 0.0, %v253
    %255 = vdwg.mxu0
    %v256 = vmul.f32 %v91, %v227
    %v257 = vmul.f32 %v94, %v230
    %v258 = vmul.f32 %v97, %v233
    %v259 = vmul.f32 %v100, %v236
    %v260 = vsub.f32 %v256, %v258
    %v261 = vsub.f32 %v257, %v259
    %v262 = vmul.f32 %v103, %v239
    %v263 = vmul.f32 %v106, %v242
    %v264 = vsub.f32 %v260, %v262
    %v265 = vsub.f32 %v261, %v263
    %v266 = vmul.f32 %v109, %v245
    %v267 = vmul.f32 %v112, %v248
    %v268 = vsub.f32 %v264, %v266
    %v269 = vsub.f32 %v265, %v267
    %v270 = vld [vmem:[%s3] sm:$0xff]
    %v271 = vld [vmem:[%s3 + $0x8] sm:$0xff]
    %273 = vset.pattern.permute.xlu0 0
    %274 = vperm.xlu0 %273, %v270
    %v275 = vpop.permute.xlu0 %274
    %278 = vset.pattern.permute.xlu0 0
    %279 = vperm.xlu0 %278, %v271
    %v280 = vpop.permute.xlu0 %279
    %v282 = vmul.f32 %v126, %v275
    %v283 = vmul.f32 %v127, %v280
    %v284 = vadd.f32 %v282, %v251
    %v285 = vadd.f32 %v283, %v254
    %v286 = vmul.f32 %v268, 2.0
    %v287 = vmul.f32 %v269, 2.0
    %v288 = vsub.f32 %v284, %v286
    %v289 = vsub.f32 %v285, %v287
    %v290 = vld [vmem:[%s4] sm:$0xff]
    %v291 = vld [vmem:[%s4 + $0x8] sm:$0xff]
    %v292 = vld [vmem:[%s4 + $0x10] sm:$0xff]
    %v293 = vld [vmem:[%s4 + $0x18] sm:$0xff]
    %v294 = vld [vmem:[%s4 + $0x20] sm:$0xff]
    %v295 = vld [vmem:[%s4 + $0x28] sm:$0xff]
    %v296 = vld [vmem:[%s4 + $0x30] sm:$0xff]
    %v297 = vld [vmem:[%s4 + $0x38] sm:$0xff]
    %v298 = vld [vmem:[%s4 + $0x40] sm:$0xff]
    %v299 = vld [vmem:[%s4 + $0x48] sm:$0xff]
    %301 = vset.pattern.permute.xlu0 0
    %302 = vperm.xlu0 %301, %v290
    %v303 = vpop.permute.xlu0 %302
    %306 = vset.pattern.permute.xlu0 0
    %307 = vperm.xlu0 %306, %v291
    %v308 = vpop.permute.xlu0 %307
    %311 = vset.pattern.permute.xlu0 0
    %312 = vperm.xlu0 %311, %v292
    %v313 = vpop.permute.xlu0 %312
    %316 = vset.pattern.permute.xlu0 0
    %317 = vperm.xlu0 %316, %v293
    %v318 = vpop.permute.xlu0 %317
    %321 = vset.pattern.permute.xlu0 0
    %322 = vperm.xlu0 %321, %v294
    %v323 = vpop.permute.xlu0 %322
    %326 = vset.pattern.permute.xlu0 0
    %327 = vperm.xlu0 %326, %v295
    %v328 = vpop.permute.xlu0 %327
    %331 = vset.pattern.permute.xlu0 0
    %332 = vperm.xlu0 %331, %v296
    %v333 = vpop.permute.xlu0 %332
    %336 = vset.pattern.permute.xlu0 0
    %337 = vperm.xlu0 %336, %v297
    %v338 = vpop.permute.xlu0 %337
    %341 = vset.pattern.permute.xlu0 0
    %342 = vperm.xlu0 %341, %v298
    %v343 = vpop.permute.xlu0 %342
    %346 = vset.pattern.permute.xlu0 0
    %347 = vperm.xlu0 %346, %v299
    %v348 = vpop.permute.xlu0 %347
    %v350 = vmul.f32 %v126, %v303
    %v351 = vmul.f32 %v127, %v308
    %v352 = vmul.f32 %v141, %v313
    %v353 = vmul.f32 %v153, %v318
    %v354 = vmul.f32 %v91, %v323
    %v355 = vmul.f32 %v94, %v328
    %v356 = vmul.f32 %v221, %v333
    %v357 = vmul.f32 %v224, %v338
    %v358 = vmul.f32 %v288, %v343
    %v359 = vmul.f32 %v289, %v348
    %v360 = vld [vmem:[%s5] sm:$0xff]
    %v361 = vld [vmem:[%s5 + $0x8] sm:$0xff]
    %v362 = vld [vmem:[%s5 + $0x10] sm:$0xff]
    %v363 = vld [vmem:[%s5 + $0x18] sm:$0xff]
    %v364 = vld [vmem:[%s5 + $0x20] sm:$0xff]
    %v365 = vld [vmem:[%s5 + $0x28] sm:$0xff]
    %v366 = vld [vmem:[%s5 + $0x30] sm:$0xff]
    %v367 = vld [vmem:[%s5 + $0x38] sm:$0xff]
    %v368 = vld [vmem:[%s5 + $0x40] sm:$0xff]
    %v369 = vld [vmem:[%s5 + $0x48] sm:$0xff]
    %371 = vset.pattern.permute.xlu0 0
    %372 = vperm.xlu0 %371, %v360
    %v373 = vpop.permute.xlu0 %372
    %376 = vset.pattern.permute.xlu0 0
    %377 = vperm.xlu0 %376, %v361
    %v378 = vpop.permute.xlu0 %377
    %381 = vset.pattern.permute.xlu0 0
    %382 = vperm.xlu0 %381, %v362
    %v383 = vpop.permute.xlu0 %382
    %386 = vset.pattern.permute.xlu0 0
    %387 = vperm.xlu0 %386, %v363
    %v388 = vpop.permute.xlu0 %387
    %391 = vset.pattern.permute.xlu0 0
    %392 = vperm.xlu0 %391, %v364
    %v393 = vpop.permute.xlu0 %392
    %396 = vset.pattern.permute.xlu0 0
    %397 = vperm.xlu0 %396, %v365
    %v398 = vpop.permute.xlu0 %397
    %401 = vset.pattern.permute.xlu0 0
    %402 = vperm.xlu0 %401, %v366
    %v403 = vpop.permute.xlu0 %402
    %406 = vset.pattern.permute.xlu0 0
    %407 = vperm.xlu0 %406, %v367
    %v408 = vpop.permute.xlu0 %407
    %411 = vset.pattern.permute.xlu0 0
    %412 = vperm.xlu0 %411, %v368
    %v413 = vpop.permute.xlu0 %412
    %416 = vset.pattern.permute.xlu0 0
    %417 = vperm.xlu0 %416, %v369
    %v418 = vpop.permute.xlu0 %417
    %v420 = vadd.f32 %v350, %v373
    %v421 = vadd.f32 %v351, %v378
    %v422 = vadd.f32 %v352, %v383
    %v423 = vadd.f32 %v353, %v388
    %v424 = vadd.f32 %v354, %v393
    %v425 = vadd.f32 %v355, %v398
    %v426 = vadd.f32 %v356, %v403
    %v427 = vadd.f32 %v357, %v408
    %v428 = vadd.f32 %v358, %v413
    %v429 = vadd.f32 %v359, %v418
    %v430 = vld [vmem:[%s6] sm:$0xf]
    %v431 = vld [vmem:[%s6 + $0x4] sm:$0xf]
    %v432 = vld [vmem:[%s6 + $0x8] sm:$0xf]
    %v433 = vld [vmem:[%s6 + $0xc] sm:$0xf]
    %v434 = vld [vmem:[%s6 + $0x10] sm:$0xf]
    %v435 = vld [vmem:[%s6 + $0x14] sm:$0xf]
    %v436 = vld [vmem:[%s6 + $0x18] sm:$0xf]
    %v437 = vld [vmem:[%s6 + $0x1c] sm:$0xf]
    %v438 = vld [vmem:[%s6 + $0x20] sm:$0xf]
    %v439 = vld [vmem:[%s6 + $0x24] sm:$0xf]
    %v440 = vld [vmem:[%s6 + $0x28] sm:$0xf]
    %v441 = vld [vmem:[%s6 + $0x2c] sm:$0xf]
    %v442 = vld [vmem:[%s6 + $0x30] sm:$0xf]
    %v443 = vld [vmem:[%s6 + $0x34] sm:$0xf]
    %v444 = vld [vmem:[%s6 + $0x38] sm:$0xf]
    %v445 = vld [vmem:[%s6 + $0x3c] sm:$0xf]
    %v446 = vld [vmem:[%s6 + $0x40] sm:$0xf]
    %v447 = vld [vmem:[%s6 + $0x44] sm:$0xf]
    %v448 = vld [vmem:[%s6 + $0x48] sm:$0xf]
    %v449 = vld [vmem:[%s6 + $0x4c] sm:$0xf]
    %v450 = vld [vmem:[%s6 + $0x50] sm:$0xf]
    %v451 = vld [vmem:[%s6 + $0x54] sm:$0xf]
    %v452 = vld [vmem:[%s6 + $0x58] sm:$0xf]
    %v453 = vld [vmem:[%s6 + $0x5c] sm:$0xf]
    %v454 = vld [vmem:[%s6 + $0x60] sm:$0xf]
    %v455 = vld [vmem:[%s6 + $0x64] sm:$0xf]
    %v456 = vld [vmem:[%s6 + $0x68] sm:$0xf]
    %v457 = vld [vmem:[%s6 + $0x6c] sm:$0xf]
    %v458 = vld [vmem:[%s6 + $0x70] sm:$0xf]
    %v459 = vld [vmem:[%s6 + $0x74] sm:$0xf]
    %v460 = vld [vmem:[%s6 + $0x78] sm:$0xf]
    %v461 = vld [vmem:[%s6 + $0x7c] sm:$0xf]
    %v462 = vpack.c.bf16 %v421, %v420
    %v463 = vpack.c.bf16 %v423, %v422
    %v464 = vpack.c.bf16 %v425, %v424
    %v465 = vpack.c.bf16 %v427, %v426
    %v466 = vpack.c.bf16 %v429, %v428
    %v467 = vld [vmem:[%s7] sm:$0xff]
    %v468 = vld [vmem:[%s7 + $0x8] sm:$0xff]
    %v469 = vld [vmem:[%s7 + $0x10] sm:$0xff]
    %v470 = vld [vmem:[%s7 + $0x18] sm:$0xff]
    %v471 = vld [vmem:[%s7 + $0x20] sm:$0xff]
    %v472 = vld [vmem:[%s7 + $0x28] sm:$0xff]
    %v473 = vld [vmem:[%s7 + $0x30] sm:$0xff]
    %v474 = vld [vmem:[%s7 + $0x38] sm:$0xff]
    %v475 = vld [vmem:[%s7 + $0x40] sm:$0xff]
    %v476 = vld [vmem:[%s7 + $0x48] sm:$0xff]
    %v477 = vld [vmem:[%s7 + $0x50] sm:$0xff]
    %v478 = vld [vmem:[%s7 + $0x58] sm:$0xff]
    %v479 = vld [vmem:[%s7 + $0x60] sm:$0xff]
    %v480 = vld [vmem:[%s7 + $0x68] sm:$0xff]
    %v481 = vld [vmem:[%s7 + $0x70] sm:$0xff]
    %v482 = vld [vmem:[%s7 + $0x78] sm:$0xff]
    %v483 = vld [vmem:[%s7 + $0x80] sm:$0xff]
    %v484 = vld [vmem:[%s7 + $0x88] sm:$0xff]
    %v485 = vld [vmem:[%s7 + $0x90] sm:$0xff]
    %v486 = vld [vmem:[%s7 + $0x98] sm:$0xff]
    %v487 = vld [vmem:[%s7 + $0xa0] sm:$0xff]
    %v488 = vld [vmem:[%s7 + $0xa8] sm:$0xff]
    %v489 = vld [vmem:[%s7 + $0xb0] sm:$0xff]
    %v490 = vld [vmem:[%s7 + $0xb8] sm:$0xff]
    %v491 = vld [vmem:[%s7 + $0xc0] sm:$0xff]
    %v492 = vld [vmem:[%s7 + $0xc8] sm:$0xff]
    %v493 = vld [vmem:[%s7 + $0xd0] sm:$0xff]
    %v494 = vld [vmem:[%s7 + $0xd8] sm:$0xff]
    %v495 = vld [vmem:[%s7 + $0xe0] sm:$0xff]
    %v496 = vld [vmem:[%s7 + $0xe8] sm:$0xff]
    %v497 = vld [vmem:[%s7 + $0xf0] sm:$0xff]
    %v498 = vld [vmem:[%s7 + $0xf8] sm:$0xff]
    %500 = vset.pattern.permute.xlu0 0
    %501 = vperm.xlu0 %500, %v467
    %v502 = vpop.permute.xlu0 %501
    %505 = vset.pattern.permute.xlu0 0
    %506 = vperm.xlu0 %505, %v468
    %v507 = vpop.permute.xlu0 %506
    %510 = vset.pattern.permute.xlu0 0
    %511 = vperm.xlu0 %510, %v469
    %v512 = vpop.permute.xlu0 %511
    %515 = vset.pattern.permute.xlu0 0
    %516 = vperm.xlu0 %515, %v470
    %v517 = vpop.permute.xlu0 %516
    %520 = vset.pattern.permute.xlu0 0
    %521 = vperm.xlu0 %520, %v471
    %v522 = vpop.permute.xlu0 %521
    %525 = vset.pattern.permute.xlu0 0
    %526 = vperm.xlu0 %525, %v472
    %v527 = vpop.permute.xlu0 %526
    %530 = vset.pattern.permute.xlu0 0
    %531 = vperm.xlu0 %530, %v473
    %v532 = vpop.permute.xlu0 %531
    %535 = vset.pattern.permute.xlu0 0
    %536 = vperm.xlu0 %535, %v474
    %v537 = vpop.permute.xlu0 %536
    %540 = vset.pattern.permute.xlu0 0
    %541 = vperm.xlu0 %540, %v475
    %v542 = vpop.permute.xlu0 %541
    %545 = vset.pattern.permute.xlu0 0
    %546 = vperm.xlu0 %545, %v476
    %v547 = vpop.permute.xlu0 %546
    %550 = vset.pattern.permute.xlu0 0
    %551 = vperm.xlu0 %550, %v477
    %v552 = vpop.permute.xlu0 %551
    %555 = vset.pattern.permute.xlu0 0
    %556 = vperm.xlu0 %555, %v478
    %v557 = vpop.permute.xlu0 %556
    %560 = vset.pattern.permute.xlu0 0
    %561 = vperm.xlu0 %560, %v479
    %v562 = vpop.permute.xlu0 %561
    %565 = vset.pattern.permute.xlu0 0
    %566 = vperm.xlu0 %565, %v480
    %v567 = vpop.permute.xlu0 %566
    %570 = vset.pattern.permute.xlu0 0
    %571 = vperm.xlu0 %570, %v481
    %v572 = vpop.permute.xlu0 %571
    %575 = vset.pattern.permute.xlu0 0
    %576 = vperm.xlu0 %575, %v482
    %v577 = vpop.permute.xlu0 %576
    %580 = vset.pattern.permute.xlu0 0
    %581 = vperm.xlu0 %580, %v483
    %v582 = vpop.permute.xlu0 %581
    %585 = vset.pattern.permute.xlu0 0
    %586 = vperm.xlu0 %585, %v484
    %v587 = vpop.permute.xlu0 %586
    %590 = vset.pattern.permute.xlu0 0
    %591 = vperm.xlu0 %590, %v485
    %v592 = vpop.permute.xlu0 %591
    %595 = vset.pattern.permute.xlu0 0
    %596 = vperm.xlu0 %595, %v486
    %v597 = vpop.permute.xlu0 %596
    %600 = vset.pattern.permute.xlu0 0
    %601 = vperm.xlu0 %600, %v487
    %v602 = vpop.permute.xlu0 %601
    %605 = vset.pattern.permute.xlu0 0
    %606 = vperm.xlu0 %605, %v488
    %v607 = vpop.permute.xlu0 %606
    %610 = vset.pattern.permute.xlu0 0
    %611 = vperm.xlu0 %610, %v489
    %v612 = vpop.permute.xlu0 %611
    %615 = vset.pattern.permute.xlu0 0
    %616 = vperm.xlu0 %615, %v490
    %v617 = vpop.permute.xlu0 %616
    %620 = vset.pattern.permute.xlu0 0
    %621 = vperm.xlu0 %620, %v491
    %v622 = vpop.permute.xlu0 %621
    %625 = vset.pattern.permute.xlu0 0
    %626 = vperm.xlu0 %625, %v492
    %v627 = vpop.permute.xlu0 %626
    %630 = vset.pattern.permute.xlu0 0
    %631 = vperm.xlu0 %630, %v493
    %v632 = vpop.permute.xlu0 %631
    %635 = vset.pattern.permute.xlu0 0
    %636 = vperm.xlu0 %635, %v494
    %v637 = vpop.permute.xlu0 %636
    %640 = vset.pattern.permute.xlu0 0
    %641 = vperm.xlu0 %640, %v495
    %v642 = vpop.permute.xlu0 %641
    %645 = vset.pattern.permute.xlu0 0
    %646 = vperm.xlu0 %645, %v496
    %v647 = vpop.permute.xlu0 %646
    %650 = vset.pattern.permute.xlu0 0
    %651 = vperm.xlu0 %650, %v497
    %v652 = vpop.permute.xlu0 %651
    %655 = vset.pattern.permute.xlu0 0
    %656 = vperm.xlu0 %655, %v498
    %v657 = vpop.permute.xlu0 %656
    %v691 = vunpack.c.l.b16 %v430
    %v692 = vunpack.c.l.b16 %v431
    %v693 = vunpack.c.l.b16 %v432
    %v694 = vunpack.c.l.b16 %v433
    %v695 = vunpack.c.l.b16 %v434
    %v696 = vunpack.c.l.b16 %v435
    %v697 = vunpack.c.l.b16 %v436
    %v698 = vunpack.c.l.b16 %v437
    %v699 = vunpack.c.l.b16 %v438
    %v700 = vunpack.c.l.b16 %v439
    %v701 = vunpack.c.l.b16 %v440
    %v702 = vunpack.c.l.b16 %v441
    %v703 = vunpack.c.l.b16 %v442
    %v704 = vunpack.c.l.b16 %v443
    %v705 = vunpack.c.l.b16 %v444
    %v706 = vunpack.c.l.b16 %v445
    %v707 = vunpack.c.l.b16 %v446
    %v708 = vunpack.c.l.b16 %v447
    %v709 = vunpack.c.l.b16 %v448
    %v710 = vunpack.c.l.b16 %v449
    %v711 = vunpack.c.l.b16 %v450
    %v712 = vunpack.c.l.b16 %v451
    %v713 = vunpack.c.l.b16 %v452
    %v714 = vunpack.c.l.b16 %v453
    %v715 = vunpack.c.l.b16 %v454
    %v716 = vunpack.c.l.b16 %v455
    %v717 = vunpack.c.l.b16 %v456
    %v718 = vunpack.c.l.b16 %v457
    %v719 = vunpack.c.l.b16 %v458
    %v720 = vunpack.c.l.b16 %v459
    %v721 = vunpack.c.l.b16 %v460
    %v722 = vunpack.c.l.b16 %v461
    %v723 = vpack.c.b16 %v692, %v691
    %v724 = vpack.c.b16 %v694, %v693
    %v725 = vpack.c.b16 %v696, %v695
    %v726 = vpack.c.b16 %v698, %v697
    %v727 = vpack.c.b16 %v700, %v699
    %v728 = vpack.c.b16 %v702, %v701
    %v729 = vpack.c.b16 %v704, %v703
    %v730 = vpack.c.b16 %v706, %v705
    %v731 = vpack.c.b16 %v708, %v707
    %v732 = vpack.c.b16 %v710, %v709
    %v733 = vpack.c.b16 %v712, %v711
    %v734 = vpack.c.b16 %v714, %v713
    %v735 = vpack.c.b16 %v716, %v715
    %v736 = vpack.c.b16 %v718, %v717
    %v737 = vpack.c.b16 %v720, %v719
    %v738 = vpack.c.b16 %v722, %v721
    %v740 = vsel %vm166, %v723, 0
    %v743 = vsel %vm166, %v724, 0
    %v746 = vsel %vm166, %v725, 0
    %v749 = vsel %vm166, %v726, 0
    %v752 = vsel %vm166, %v727, 0
    %v755 = vsel %vm166, %v728, 0
    %v758 = vsel %vm166, %v729, 0
    %v761 = vsel %vm166, %v730, 0
    %v764 = vsel %vm166, %v731, 0
    %v767 = vsel %vm166, %v732, 0
    %v770 = vsel %vm166, %v733, 0
    %v773 = vsel %vm166, %v734, 0
    %v776 = vsel %vm166, %v735, 0
    %v779 = vsel %vm166, %v736, 0
    %v782 = vsel %vm166, %v737, 0
    %v785 = vsel %vm166, %v738, 0
    %787 = vmatpush.bf16.msra.mxu0 0
    %788 = vmatpush.bf16.msra.mxu0 0
    %789 = vmatpush.bf16.msra.mxu0 0
    %790 = vmatpush.bf16.msra.mxu0 %v466
    %791 = vmatpush.bf16.msra.mxu0 %v465
    %792 = vmatpush.bf16.msra.mxu0 %v464
    %793 = vmatpush.bf16.msra.mxu0 %v463
    %794 = vmatpush.bf16.msra.mxu0 %v462
    %795 = vmatmul.bf16.gmra.mxu0 %v740
    %v796 = vpop.f32.mrf.mxu0
    %v797 = vadd.f32 %v502, %v796
    %v798 = vpop.f32.mrf.mxu0
    %v799 = vadd.f32 %v507, %v798
    %800 = vmatmul.bf16.gmra.mxu0 %v743
    %v801 = vpop.f32.mrf.mxu0
    %v802 = vadd.f32 %v512, %v801
    %v803 = vpop.f32.mrf.mxu0
    %v804 = vadd.f32 %v517, %v803
    %805 = vmatmul.bf16.gmra.mxu0 %v746
    %v806 = vpop.f32.mrf.mxu0
    %v807 = vadd.f32 %v522, %v806
    %v808 = vpop.f32.mrf.mxu0
    %v809 = vadd.f32 %v527, %v808
    %810 = vmatmul.bf16.gmra.mxu0 %v749
    %v811 = vpop.f32.mrf.mxu0
    %v812 = vadd.f32 %v532, %v811
    %v813 = vpop.f32.mrf.mxu0
    %v814 = vadd.f32 %v537, %v813
    %815 = vmatmul.bf16.gmra.mxu0 %v752
    %v816 = vpop.f32.mrf.mxu0
    %v817 = vadd.f32 %v542, %v816
    %v818 = vpop.f32.mrf.mxu0
    %v819 = vadd.f32 %v547, %v818
    %820 = vmatmul.bf16.gmra.mxu0 %v755
    %v821 = vpop.f32.mrf.mxu0
    %v822 = vadd.f32 %v552, %v821
    %v823 = vpop.f32.mrf.mxu0
    %v824 = vadd.f32 %v557, %v823
    %825 = vmatmul.bf16.gmra.mxu0 %v758
    %v826 = vpop.f32.mrf.mxu0
    %v827 = vadd.f32 %v562, %v826
    %v828 = vpop.f32.mrf.mxu0
    %v829 = vadd.f32 %v567, %v828
    %830 = vmatmul.bf16.gmra.mxu0 %v761
    %v831 = vpop.f32.mrf.mxu0
    %v832 = vadd.f32 %v572, %v831
    %v833 = vpop.f32.mrf.mxu0
    %v834 = vadd.f32 %v577, %v833
    %835 = vmatmul.bf16.gmra.mxu0 %v764
    %v836 = vpop.f32.mrf.mxu0
    %v837 = vadd.f32 %v582, %v836
    %v838 = vpop.f32.mrf.mxu0
    %v839 = vadd.f32 %v587, %v838
    %840 = vmatmul.bf16.gmra.mxu0 %v767
    %v841 = vpop.f32.mrf.mxu0
    %v842 = vadd.f32 %v592, %v841
    %v843 = vpop.f32.mrf.mxu0
    %v844 = vadd.f32 %v597, %v843
    %845 = vmatmul.bf16.gmra.mxu0 %v770
    %v846 = vpop.f32.mrf.mxu0
    %v847 = vadd.f32 %v602, %v846
    %v848 = vpop.f32.mrf.mxu0
    %v849 = vadd.f32 %v607, %v848
    %850 = vmatmul.bf16.gmra.mxu0 %v773
    %v851 = vpop.f32.mrf.mxu0
    %v852 = vadd.f32 %v612, %v851
    %v853 = vpop.f32.mrf.mxu0
    %v854 = vadd.f32 %v617, %v853
    %855 = vmatmul.bf16.gmra.mxu0 %v776
    %v856 = vpop.f32.mrf.mxu0
    %v857 = vadd.f32 %v622, %v856
    %v858 = vpop.f32.mrf.mxu0
    %v859 = vadd.f32 %v627, %v858
    %860 = vmatmul.bf16.gmra.mxu0 %v779
    %v861 = vpop.f32.mrf.mxu0
    %v862 = vadd.f32 %v632, %v861
    %v863 = vpop.f32.mrf.mxu0
    %v864 = vadd.f32 %v637, %v863
    %865 = vmatmul.bf16.gmra.mxu0 %v782
    %v866 = vpop.f32.mrf.mxu0
    %v867 = vadd.f32 %v642, %v866
    %v868 = vpop.f32.mrf.mxu0
    %v869 = vadd.f32 %v647, %v868
    %870 = vmatmul.bf16.gmra.mxu0 %v785
    %v871 = vpop.f32.mrf.mxu0
    %v872 = vadd.f32 %v652, %v871
    %v873 = vpop.f32.mrf.mxu0
    %v874 = vadd.f32 %v657, %v873
    %875 = vdwg.mxu0
    %v876 = vmax.f32 %v797, 0.0
    %v877 = vmax.f32 %v799, 0.0
    %v878 = vmax.f32 %v802, 0.0
    %v879 = vmax.f32 %v804, 0.0
    %v880 = vmax.f32 %v807, 0.0
    %v881 = vmax.f32 %v809, 0.0
    %v882 = vmax.f32 %v812, 0.0
    %v883 = vmax.f32 %v814, 0.0
    %v884 = vmax.f32 %v817, 0.0
    %v885 = vmax.f32 %v819, 0.0
    %v886 = vmax.f32 %v822, 0.0
    %v887 = vmax.f32 %v824, 0.0
    %v888 = vmax.f32 %v827, 0.0
    %v889 = vmax.f32 %v829, 0.0
    %v890 = vmax.f32 %v832, 0.0
    %v891 = vmax.f32 %v834, 0.0
    %v892 = vmax.f32 %v837, 0.0
    %v893 = vmax.f32 %v839, 0.0
    %v894 = vmax.f32 %v842, 0.0
    %v895 = vmax.f32 %v844, 0.0
    %v896 = vmax.f32 %v847, 0.0
    %v897 = vmax.f32 %v849, 0.0
    %v898 = vmax.f32 %v852, 0.0
    %v899 = vmax.f32 %v854, 0.0
    %v900 = vmax.f32 %v857, 0.0
    %v901 = vmax.f32 %v859, 0.0
    %v902 = vmax.f32 %v862, 0.0
    %v903 = vmax.f32 %v864, 0.0
    %v904 = vmax.f32 %v867, 0.0
    %v905 = vmax.f32 %v869, 0.0
    %v906 = vmax.f32 %v872, 0.0
    %v907 = vmax.f32 %v874, 0.0
    %v908 = vld [vmem:[%s8] sm:$0xff]
    %v909 = vld [vmem:[%s8 + $0x8] sm:$0x33]
    %v910 = vpack.c.bf16 %v877, %v876
    %v911 = vpack.c.bf16 %v879, %v878
    %v912 = vpack.c.bf16 %v881, %v880
    %v913 = vpack.c.bf16 %v883, %v882
    %v914 = vpack.c.bf16 %v885, %v884
    %v915 = vpack.c.bf16 %v887, %v886
    %v916 = vpack.c.bf16 %v889, %v888
    %v917 = vpack.c.bf16 %v891, %v890
    %v918 = vpack.c.bf16 %v893, %v892
    %v919 = vpack.c.bf16 %v895, %v894
    %v920 = vpack.c.bf16 %v897, %v896
    %v921 = vpack.c.bf16 %v899, %v898
    %v922 = vpack.c.bf16 %v901, %v900
    %v923 = vpack.c.bf16 %v903, %v902
    %v924 = vpack.c.bf16 %v905, %v904
    %v925 = vpack.c.bf16 %v907, %v906
    %v926 = vld [vmem:[%s9] sm:$0xff]
    %v927 = vld [vmem:[%s9 + $0x8] sm:$0x7]
    %929 = vset.pattern.permute.xlu0 0
    %930 = vperm.xlu0 %929, %v926
    %v931 = vpop.permute.xlu0 %930
    %934 = vset.pattern.permute.xlu0 0
    %935 = vperm.xlu0 %934, %v927
    %v936 = vpop.permute.xlu0 %935
    %v940 = vunpack.c.l.b16 %v908
    %v941 = vunpack.c.h.b16 %v908
    %v942 = vunpack.c.l.b16 %v909
    %v943 = vunpack.c.h.b16 %v909
    %v944 = vpack.c.b16 %v942, %v940
    %v945 = vpack.c.b16 %v943, %v941
    %948 = vmatpush.bf16.msra.mxu0 %v917
    %949 = vmatpush.bf16.msra.mxu0 %v916
    %950 = vmatpush.bf16.msra.mxu0 %v915
    %951 = vmatpush.bf16.msra.mxu0 %v914
    %952 = vmatpush.bf16.msra.mxu0 %v913
    %953 = vmatpush.bf16.msra.mxu0 %v912
    %954 = vmatpush.bf16.msra.mxu0 %v911
    %955 = vmatpush.bf16.msra.mxu0 %v910
    %956 = vmatmul.bf16.gmra.mxu0 %v944
    %v957 = vpop.f32.mrf.mxu0
    %v958 = vadd.f32 %v931, %v957
    %v959 = vpop.f32.mrf.mxu0
    %v960 = vadd.f32 %v936, %v959
    %961 = vdwg.mxu0
    %962 = vmatpush.bf16.msra.mxu0 %v925
    %963 = vmatpush.bf16.msra.mxu0 %v924
    %964 = vmatpush.bf16.msra.mxu0 %v923
    %965 = vmatpush.bf16.msra.mxu0 %v922
    %966 = vmatpush.bf16.msra.mxu0 %v921
    %967 = vmatpush.bf16.msra.mxu0 %v920
    %968 = vmatpush.bf16.msra.mxu0 %v919
    %969 = vmatpush.bf16.msra.mxu0 %v918
    %970 = vmatmul.bf16.gmra.mxu0 %v945
    %v971 = vpop.f32.mrf.mxu0
    %v972 = vadd.f32 %v958, %v971
    %v973 = vpop.f32.mrf.mxu0
    %v974 = vadd.f32 %v960, %v973
    %975 = vdwg.mxu0
    %v976 = vxor.u32 %v972, 2147483648
    %v977 = vxor.u32 %v974, 2147483648
    %v978 = vmul.f32 %v976, 1.442695
    %v979 = vpow.pop %v978
    %v980 = vmul.f32 %v977, 1.442695
    %v981 = vpow.pop %v980
    %v982 = vadd.f32 %v979, 1.0
    %v983 = vadd.f32 %v981, 1.0
    %v984 = vrcp.pop %v982
    %v985 = vmul.f32 %v982, %v984
    %v986 = vsub.f32 1.0, %v985
    %v987 = vmul.f32 %v984, %v986
    %v988 = vadd.f32 %v984, %v987
    %vm989 = vweird.f32 %v982
    %vm990 = vweird.f32 %v984
    %vm991 = vmor %vm989, %vm990
    %v992 = vsel %vm991, %v984, %v988
    %v993 = vand.u32 2147483647, %v982
    %vm994 = vcmp.eq.f32.partialorder %v993, 8.507059e+37
    %v995 = vand.u32 %v982, 2147483648
    %v996 = vor.u32 1.1754944e-38, %v995
    %v997 = vsel %vm994, %v996, %v992
    %v998 = vmul.f32 1.0, %v997
    %v999 = vrcp.pop %v983
    %v1000 = vmul.f32 %v983, %v999
    %v1001 = vsub.f32 1.0, %v1000
    %v1002 = vmul.f32 %v999, %v1001
    %v1003 = vadd.f32 %v999, %v1002
    %vm1004 = vweird.f32 %v983
    %vm1005 = vweird.f32 %v999
    %vm1006 = vmor %vm1004, %vm1005
    %v1007 = vsel %vm1006, %v999, %v1003
    %v1008 = vand.u32 2147483647, %v983
    %vm1009 = vcmp.eq.f32.partialorder %v1008, 8.507059e+37
    %v1010 = vand.u32 %v983, 2147483648
    %v1011 = vor.u32 1.1754944e-38, %v1010
    %v1012 = vsel %vm1009, %v1011, %v1007
    %v1013 = vmul.f32 1.0, %v1012
    %vm1014 = vcmask 130048
    %1015 = vst.msk [vmem:[#allocation2] sm:$0xff] %vm1014, %v998
    %vm1016 = vcmask 124928
    %1017 = vst.msk [vmem:[#allocation2 + $0x8] sm:$0x7] %vm1016, %v1013
    // Predicated region
    $region42: #{tpu_custom_call.1} parent=1 // pred_check
      _
    $region43: #{tpu_custom_call.1} parent=1 // pred_check_branch
      %1019 = sbr.rel (0) target = $region45
    $region44: #{tpu_custom_call.1} parent=1 // pred_region
      %1021 = vsyncadd [#allocation3], 0
      %s1022 = sshll.u32 [#allocation2], 4
      %s1023 = int_to_ptr.vmem [resolvable:$true] %s1022
      %s1024 = sshll.u32 %s10, 4
      %s1025 = int_to_ptr.hbm [resolvable:$true] %s1024
      %1030 = dma.vmem_to_hbm [thread:$0]  %s1023, 256, %s1025, [#allocation3], 128, 128, 8
    $region45: #{tpu_custom_call.1} parent=1 // pred_fallthru
      _
    // Predicated region
    $region46: #{tpu_custom_call.1} parent=1 // pred_check
      _
    $region47: #{tpu_custom_call.1} parent=1 // pred_check_branch
      %1032 = sbr.rel (0) target = $region49
    $region48: #{tpu_custom_call.1} parent=1 // pred_region
      %1034 = dma.done [#allocation3], 256
    $region49: #{tpu_custom_call.1} parent=1 // pred_fallthru
      _
    %1035 = vsyncpa [#allocation3], 1

</llo_original>
